<compile_context>
chip_gen: v7x
topology: tpu7x:2x2x1
jax: 0.10.0
libtpu: 0.0.40
codegen_flags: <defaults>
</compile_context>

<pallas_src>
import functools

import jax
import jax.numpy as jnp
from jax.experimental import pallas as pl
from jax.experimental.pallas import tpu as pltpu

HIDDEN_SIZE = 128
HALF = HIDDEN_SIZE // 2
OUT_PAD = 128  # lane-dense padded output width (>= act_dim)


def _round_up(x, m):
    return (x + m - 1) // m * m


def actor_kernel(
    obs_ref,  # [TB, obs_dim]
    w1_ref,   # [obs_dim, 128]  block-diagonal (robot block | anchor block)
    b1_ref,   # [1, 128]
    w2_ref,   # [128, 128]
    b2_ref,   # [1, 128]
    w3_ref,   # [128, 128]
    b3_ref,   # [1, 128]
    w4_ref,   # [128, 128]  (columns >= act_dim are zero padding)
    b4_ref,   # [1, 128]
    out_ref,  # [TB, 128]
):
    f32 = jnp.float32
    x = obs_ref[...]
    # Block-diagonal first layer == concat(tanh(xr@W1r+b1r), tanh(xa@W1a+b1a)).
    h = jnp.tanh(jnp.dot(x, w1_ref[...], preferred_element_type=f32) + b1_ref[...])
    h = jnp.tanh(jnp.dot(h, w2_ref[...], preferred_element_type=f32) + b2_ref[...])
    h = jnp.tanh(jnp.dot(h, w3_ref[...], preferred_element_type=f32) + b3_ref[...])
    out_ref[...] = jnp.tanh(
        jnp.dot(h, w4_ref[...], preferred_element_type=f32) + b4_ref[...]
    ).astype(out_ref.dtype)


def init_actor_params(key, obs_dim, act_dim):
    """Deterministic parameter init (shapes match the PyTorch module)."""
    ks = jax.random.split(key, 10)

    def lin(kw, kb, fan_in, fan_out):
        bound = 1.0 / jnp.sqrt(jnp.float32(fan_in))
        # stored as [in, out] (transpose of torch's [out, in]) so kernel does x @ W
        w = jax.random.uniform(kw, (fan_in, fan_out), jnp.float32, -bound, bound)
        b = jax.random.uniform(kb, (1, fan_out), jnp.float32, -bound, bound)
        return w, b

    w1r, b1r = lin(ks[0], ks[1], obs_dim - 3, HALF)
    w1a, b1a = lin(ks[2], ks[3], 3, HALF)
    w2, b2 = lin(ks[4], ks[5], HIDDEN_SIZE, HIDDEN_SIZE)
    w3, b3 = lin(ks[6], ks[7], HIDDEN_SIZE, HIDDEN_SIZE)
    w4, b4 = lin(ks[8], ks[9], HIDDEN_SIZE, act_dim)
    std = jnp.ones((act_dim,), jnp.float32)
    return dict(w1r=w1r, b1r=b1r, w1a=w1a, b1a=b1a,
                w2=w2, b2=b2, w3=w3, b3=b3, w4=w4, b4=b4, std=std)


@functools.partial(jax.jit, static_argnames=("act_dim",))
def actor_forward(obs, params, act_dim):
    """Returns (action_mu [B, act_dim], action_std [act_dim])."""
    B, obs_dim = obs.shape
    robot_dim = obs_dim - 3

    # ---------------- wrapper glue (layout only, traced once under jit) ----
    # Layer 1 as one block-diagonal matmul; off-diagonal blocks are EXACT zeros
    # so the two branches never leak into each other.
    w1 = jnp.zeros((obs_dim, HIDDEN_SIZE), jnp.float32)
    w1 = w1.at[:robot_dim, :HALF].set(params["w1r"])
    w1 = w1.at[robot_dim:, HALF:].set(params["w1a"])
    b1 = jnp.concatenate([params["b1r"], params["b1a"]], axis=1)

    # Lane-dense output: zero-pad W4 / b4 up to 128 columns.
    w4 = jnp.zeros((HIDDEN_SIZE, OUT_PAD), jnp.float32).at[:, :act_dim].set(params["w4"])
    b4 = jnp.zeros((1, OUT_PAD), jnp.float32).at[:, :act_dim].set(params["b4"])

    # Batch tiling: TB multiple of 8 (f32 sublane), capped at 512
    # (measured sweet spot); pad B to a multiple of TB.
    TB = min(512, _round_up(B, 8))
    B_pad = _round_up(B, TB)
    if B_pad != B:
        obs = jnp.pad(obs, ((0, B_pad - B), (0, 0)))
    grid = (B_pad // TB,)

    batch_map = lambda i: (i, 0)
    const_map = lambda i: (0, 0)
    wspec = lambda shape: pl.BlockSpec(shape, const_map)  # resident weights

    # Advisory cost estimate.
    flops = 2 * B_pad * (obs_dim * HIDDEN_SIZE
                         + 2 * HIDDEN_SIZE * HIDDEN_SIZE
                         + HIDDEN_SIZE * OUT_PAD)
    transcendentals = B_pad * (3 * HIDDEN_SIZE + OUT_PAD)
    weight_bytes = 4 * (obs_dim * HIDDEN_SIZE + 2 * HIDDEN_SIZE * HIDDEN_SIZE
                        + HIDDEN_SIZE * OUT_PAD + 3 * HIDDEN_SIZE + OUT_PAD)
    bytes_accessed = 4 * B_pad * (obs_dim + OUT_PAD) + weight_bytes

    mu_padded = pl.pallas_call(
        actor_kernel,
        out_shape=jax.ShapeDtypeStruct((B_pad, OUT_PAD), jnp.float32),
        grid=grid,
        in_specs=[
            pl.BlockSpec((TB, obs_dim), batch_map),           # obs tile
            wspec((obs_dim, HIDDEN_SIZE)), wspec((1, HIDDEN_SIZE)),   # W1, b1
            wspec((HIDDEN_SIZE, HIDDEN_SIZE)), wspec((1, HIDDEN_SIZE)),  # W2, b2
            wspec((HIDDEN_SIZE, HIDDEN_SIZE)), wspec((1, HIDDEN_SIZE)),  # W3, b3
            wspec((HIDDEN_SIZE, OUT_PAD)), wspec((1, OUT_PAD)),          # W4, b4
        ],
        out_specs=pl.BlockSpec((TB, OUT_PAD), batch_map),
        compiler_params=pltpu.CompilerParams(
            dimension_semantics=("parallel",)),
        cost_estimate=pl.CostEstimate(
            flops=flops,
            transcendentals=transcendentals,
            bytes_accessed=bytes_accessed),
    )(obs, w1, b1, params["w2"], params["b2"], params["w3"], params["b3"], w4, b4)

    # TODO(synk): for v6e/v7x throughput, cast matmul inputs to bf16 (keep f32
    # accumulation via preferred_element_type) once the test tolerance is relaxed.
    mu = mu_padded[:B, :act_dim]
    return mu, params["std"]


def _ref(obs, p):
    hr = jnp.tanh(obs[:, :-3] @ p["w1r"] + p["b1r"])
    ha = jnp.tanh(obs[:, -3:] @ p["w1a"] + p["b1a"])
    h = jnp.concatenate([hr, ha], axis=1)
    h = jnp.tanh(h @ p["w2"] + p["b2"])
    h = jnp.tanh(h @ p["w3"] + p["b3"])
    return jnp.tanh(h @ p["w4"] + p["b4"])


if __name__ == "__main__":
    key = jax.random.PRNGKey(0)
    k_obs, k_obs2, k_params = jax.random.split(key, 3)

    # Shapes consistent with the module: 16 robot dims + 3 anchor dims.
    OBS_DIM, ACT_DIM = 19, 8
    params = init_actor_params(k_params, OBS_DIM, ACT_DIM)

    # Small batch (exercises the B-pad-to-sublane path, grid = (1,)).
    B = 4
    obs = jax.random.normal(k_obs, (B, OBS_DIM), jnp.float32)
    mu, std = actor_forward(obs, params, ACT_DIM)
    jax.block_until_ready(mu)
    jax.block_until_ready(std)
    assert mu.shape == (B, ACT_DIM)
    assert std.shape == (ACT_DIM,)
    assert jnp.allclose(mu, _ref(obs, params), atol=1e-5, rtol=1e-5)

    # Larger batch (exercises multi-tile grid + tail padding).
    B2 = 1030
    obs2 = jax.random.normal(k_obs2, (B2, OBS_DIM), jnp.float32)
    mu2, _ = actor_forward(obs2, params, ACT_DIM)
    jax.block_until_ready(mu2)
    assert mu2.shape == (B2, ACT_DIM)
    assert jnp.allclose(mu2, _ref(obs2, params), atol=1e-5, rtol=1e-5)

    print("KERNEL_OK")
</pallas_src>

<mosaic_0001>
module attributes {stable_mosaic.version = 11 : i64} {
  func.func @actor_kernel(%arg0: i32, %arg1: memref<8x19xf32, #tpu.memory_space<vmem>>, %arg2: memref<19x128xf32, #tpu.memory_space<vmem>>, %arg3: memref<1x128xf32, #tpu.memory_space<vmem>>, %arg4: memref<128x128xf32, #tpu.memory_space<vmem>>, %arg5: memref<1x128xf32, #tpu.memory_space<vmem>>, %arg6: memref<128x128xf32, #tpu.memory_space<vmem>>, %arg7: memref<1x128xf32, #tpu.memory_space<vmem>>, %arg8: memref<128x128xf32, #tpu.memory_space<vmem>>, %arg9: memref<1x128xf32, #tpu.memory_space<vmem>>, %arg10: memref<8x128xf32, #tpu.memory_space<vmem>>) attributes {dimension_semantics = [#tpu.dimension_semantics<parallel>], iteration_bounds = array<i64: 1>, scalar_prefetch = 0 : i64, scratch_operands = 0 : i64, tpu.core_type = #tpu.core_type<tc>, window_params = [{transform_indices = @transform_0, window_bounds = array<i64: 8, 19>}, {pipeline_mode = #tpu.pipeline_mode<synchronous>, transform_indices = @transform_1, window_bounds = array<i64: 19, 128>}, {pipeline_mode = #tpu.pipeline_mode<synchronous>, transform_indices = @transform_2, window_bounds = array<i64: 1, 128>}, {pipeline_mode = #tpu.pipeline_mode<synchronous>, transform_indices = @transform_3, window_bounds = array<i64: 128, 128>}, {pipeline_mode = #tpu.pipeline_mode<synchronous>, transform_indices = @transform_4, window_bounds = array<i64: 1, 128>}, {pipeline_mode = #tpu.pipeline_mode<synchronous>, transform_indices = @transform_5, window_bounds = array<i64: 128, 128>}, {pipeline_mode = #tpu.pipeline_mode<synchronous>, transform_indices = @transform_6, window_bounds = array<i64: 1, 128>}, {pipeline_mode = #tpu.pipeline_mode<synchronous>, transform_indices = @transform_7, window_bounds = array<i64: 128, 128>}, {pipeline_mode = #tpu.pipeline_mode<synchronous>, transform_indices = @transform_8, window_bounds = array<i64: 1, 128>}, {transform_indices = @transform_9, window_bounds = array<i64: 8, 128>}]} {
    %c0 = arith.constant 0 : index
    %c0_0 = arith.constant 0 : index
    %0 = vector.load %arg1[%c0, %c0_0] : memref<8x19xf32, #tpu.memory_space<vmem>>, vector<8x19xf32>
    %c0_1 = arith.constant 0 : index
    %c0_2 = arith.constant 0 : index
    %1 = vector.load %arg2[%c0_1, %c0_2] : memref<19x128xf32, #tpu.memory_space<vmem>>, vector<19x128xf32>
    %cst = arith.constant dense<0.000000e+00> : vector<8x128xf32>
    %2 = tpu.matmul %0, %1, %cst {dimension_numbers = #tpu.dot_dimension_numbers<[1], [0], [0], [1], [0, 0, 1, 1], [], []>} : vector<8x19xf32>, vector<19x128xf32>, vector<8x128xf32> -> vector<8x128xf32>
    %c0_3 = arith.constant 0 : index
    %c0_4 = arith.constant 0 : index
    %3 = vector.load %arg3[%c0_3, %c0_4] : memref<1x128xf32, #tpu.memory_space<vmem>>, vector<1x128xf32>
    %4 = vector.broadcast %3 : vector<1x128xf32> to vector<8x128xf32>
    %5 = arith.addf %2, %4 : vector<8x128xf32>
    %6 = math.tanh %5 : vector<8x128xf32>
    %c0_5 = arith.constant 0 : index
    %c0_6 = arith.constant 0 : index
    %7 = vector.load %arg4[%c0_5, %c0_6] : memref<128x128xf32, #tpu.memory_space<vmem>>, vector<128x128xf32>
    %cst_7 = arith.constant dense<0.000000e+00> : vector<8x128xf32>
    %8 = tpu.matmul %6, %7, %cst_7 {dimension_numbers = #tpu.dot_dimension_numbers<[1], [0], [0], [1], [0, 0, 1, 1], [], []>} : vector<8x128xf32>, vector<128x128xf32>, vector<8x128xf32> -> vector<8x128xf32>
    %c0_8 = arith.constant 0 : index
    %c0_9 = arith.constant 0 : index
    %9 = vector.load %arg5[%c0_8, %c0_9] : memref<1x128xf32, #tpu.memory_space<vmem>>, vector<1x128xf32>
    %10 = vector.broadcast %9 : vector<1x128xf32> to vector<8x128xf32>
    %11 = arith.addf %8, %10 : vector<8x128xf32>
    %12 = math.tanh %11 : vector<8x128xf32>
    %c0_10 = arith.constant 0 : index
    %c0_11 = arith.constant 0 : index
    %13 = vector.load %arg6[%c0_10, %c0_11] : memref<128x128xf32, #tpu.memory_space<vmem>>, vector<128x128xf32>
    %cst_12 = arith.constant dense<0.000000e+00> : vector<8x128xf32>
    %14 = tpu.matmul %12, %13, %cst_12 {dimension_numbers = #tpu.dot_dimension_numbers<[1], [0], [0], [1], [0, 0, 1, 1], [], []>} : vector<8x128xf32>, vector<128x128xf32>, vector<8x128xf32> -> vector<8x128xf32>
    %c0_13 = arith.constant 0 : index
    %c0_14 = arith.constant 0 : index
    %15 = vector.load %arg7[%c0_13, %c0_14] : memref<1x128xf32, #tpu.memory_space<vmem>>, vector<1x128xf32>
    %16 = vector.broadcast %15 : vector<1x128xf32> to vector<8x128xf32>
    %17 = arith.addf %14, %16 : vector<8x128xf32>
    %18 = math.tanh %17 : vector<8x128xf32>
    %c0_15 = arith.constant 0 : index
    %c0_16 = arith.constant 0 : index
    %19 = vector.load %arg8[%c0_15, %c0_16] : memref<128x128xf32, #tpu.memory_space<vmem>>, vector<128x128xf32>
    %cst_17 = arith.constant dense<0.000000e+00> : vector<8x128xf32>
    %20 = tpu.matmul %18, %19, %cst_17 {dimension_numbers = #tpu.dot_dimension_numbers<[1], [0], [0], [1], [0, 0, 1, 1], [], []>} : vector<8x128xf32>, vector<128x128xf32>, vector<8x128xf32> -> vector<8x128xf32>
    %c0_18 = arith.constant 0 : index
    %c0_19 = arith.constant 0 : index
    %21 = vector.load %arg9[%c0_18, %c0_19] : memref<1x128xf32, #tpu.memory_space<vmem>>, vector<1x128xf32>
    %22 = vector.broadcast %21 : vector<1x128xf32> to vector<8x128xf32>
    %23 = arith.addf %20, %22 : vector<8x128xf32>
    %24 = math.tanh %23 : vector<8x128xf32>
    %c0_20 = arith.constant 0 : index
    %c0_21 = arith.constant 0 : index
    %25 = vector.load %arg10[%c0_20, %c0_21] : memref<8x128xf32, #tpu.memory_space<vmem>>, vector<8x128xf32>
    tpu.vector_store %arg10[%c0_20, %c0_21], %24 {strides = array<i32>} : memref<8x128xf32, #tpu.memory_space<vmem>>, vector<8x128xf32>,
    return
  }
  func.func @transform_0(%arg0: i32) -> (i32, i32) {
    %c0_i32 = arith.constant 0 : i32
    %c0_i32_0 = arith.constant 0 : i32
    return %arg0, %c0_i32 : i32, i32
  }
  func.func @transform_1(%arg0: i32) -> (i32, i32) {
    %c0_i32 = arith.constant 0 : i32
    %c0_i32_0 = arith.constant 0 : i32
    %c0_i32_1 = arith.constant 0 : i32
    return %c0_i32, %c0_i32_0 : i32, i32
  }
  func.func @transform_2(%arg0: i32) -> (i32, i32) {
    %c0_i32 = arith.constant 0 : i32
    %c0_i32_0 = arith.constant 0 : i32
    %c0_i32_1 = arith.constant 0 : i32
    return %c0_i32, %c0_i32_0 : i32, i32
  }
  func.func @transform_3(%arg0: i32) -> (i32, i32) {
    %c0_i32 = arith.constant 0 : i32
    %c0_i32_0 = arith.constant 0 : i32
    %c0_i32_1 = arith.constant 0 : i32
    return %c0_i32, %c0_i32_0 : i32, i32
  }
  func.func @transform_4(%arg0: i32) -> (i32, i32) {
    %c0_i32 = arith.constant 0 : i32
    %c0_i32_0 = arith.constant 0 : i32
    %c0_i32_1 = arith.constant 0 : i32
    return %c0_i32, %c0_i32_0 : i32, i32
  }
  func.func @transform_5(%arg0: i32) -> (i32, i32) {
    %c0_i32 = arith.constant 0 : i32
    %c0_i32_0 = arith.constant 0 : i32
    %c0_i32_1 = arith.constant 0 : i32
    return %c0_i32, %c0_i32_0 : i32, i32
  }
  func.func @transform_6(%arg0: i32) -> (i32, i32) {
    %c0_i32 = arith.constant 0 : i32
    %c0_i32_0 = arith.constant 0 : i32
    %c0_i32_1 = arith.constant 0 : i32
    return %c0_i32, %c0_i32_0 : i32, i32
  }
  func.func @transform_7(%arg0: i32) -> (i32, i32) {
    %c0_i32 = arith.constant 0 : i32
    %c0_i32_0 = arith.constant 0 : i32
    %c0_i32_1 = arith.constant 0 : i32
    return %c0_i32, %c0_i32_0 : i32, i32
  }
  func.func @transform_8(%arg0: i32) -> (i32, i32) {
    %c0_i32 = arith.constant 0 : i32
    %c0_i32_0 = arith.constant 0 : i32
    %c0_i32_1 = arith.constant 0 : i32
    return %c0_i32, %c0_i32_0 : i32, i32
  }
  func.func @transform_9(%arg0: i32) -> (i32, i32) {
    %c0_i32 = arith.constant 0 : i32
    %c0_i32_0 = arith.constant 0 : i32
    return %arg0, %c0_i32 : i32, i32
  }
}

</mosaic_0001>

<llo_original>
// kernel: actor_forward.1
$region0: #{actor_forward.1}
  #allocation0 [shape = 'u32[]', space=smem, size = 0x4, offset = 0x4, fixed_abs, tag = 'smem constant byte address 0x4 - core index']
  #allocation1 [shape = 'u32[144,128]{1,0:T(1,128)}', space=vmem, size = 0x12000, scoped, tag = 'internal scratch']
  %s0 = inlined_call_operand.vmem [shape: f32[8,19], index: 0, kind: input, shape index: {}]
  %s1 = inlined_call_operand.vmem [shape: f32[19,128], index: 1, kind: input, shape index: {}]
  %s2 = inlined_call_operand.vmem [shape: f32[1,128], index: 2, kind: input, shape index: {}]
  %s3 = inlined_call_operand.vmem [shape: f32[128,128], index: 3, kind: input, shape index: {}]
  %s4 = inlined_call_operand.vmem [shape: f32[1,128], index: 4, kind: input, shape index: {}]
  %s5 = inlined_call_operand.vmem [shape: f32[128,128], index: 5, kind: input, shape index: {}]
  %s6 = inlined_call_operand.vmem [shape: f32[1,128], index: 6, kind: input, shape index: {}]
  %s7 = inlined_call_operand.vmem [shape: f32[128,128], index: 7, kind: input, shape index: {}]
  %s8 = inlined_call_operand.vmem [shape: f32[1,128], index: 8, kind: input, shape index: {}]
  %s9 = inlined_call_operand.vmem [shape: f32[8,128], index: 9, kind: output, shape index: {}]
  %s10 = sld [smem:[#allocation0]]
  $region46: #{actor_forward.1} parent=0
    _
  %s12 = ssub.s32 1, %s10
  %s13 = scalar_select 0, %s12, %s10
  // Predicated region
  $region2: #{actor_forward.1} parent=0 // pred_check
    _
  $region3: #{actor_forward.1} parent=0 // pred_check_branch
    %15 = sbr.rel (0) target = $region5
  $region4: #{actor_forward.1} parent=0 // pred_region
    _
  $region5: #{actor_forward.1} parent=0 // pred_fallthru
    _
  // Predicated region
  $region6: #{actor_forward.1} parent=0 // pred_check
    _
  $region7: #{actor_forward.1} parent=0 // pred_check_branch
    %17 = sbr.rel (0) target = $region9
  $region8: #{actor_forward.1} parent=0 // pred_region
    _
  $region9: #{actor_forward.1} parent=0 // pred_fallthru
    _
  // Predicated region
  $region10: #{actor_forward.1} parent=0 // pred_check
    _
  $region11: #{actor_forward.1} parent=0 // pred_check_branch
    %19 = sbr.rel (0) target = $region13
  $region12: #{actor_forward.1} parent=0 // pred_region
    _
  $region13: #{actor_forward.1} parent=0 // pred_fallthru
    _
  // Predicated region
  $region14: #{actor_forward.1} parent=0 // pred_check
    _
  $region15: #{actor_forward.1} parent=0 // pred_check_branch
    %21 = sbr.rel (0) target = $region17
  $region16: #{actor_forward.1} parent=0 // pred_region
    _
  $region17: #{actor_forward.1} parent=0 // pred_fallthru
    _
  // Predicated region
  $region18: #{actor_forward.1} parent=0 // pred_check
    _
  $region19: #{actor_forward.1} parent=0 // pred_check_branch
    %23 = sbr.rel (0) target = $region21
  $region20: #{actor_forward.1} parent=0 // pred_region
    _
  $region21: #{actor_forward.1} parent=0 // pred_fallthru
    _
  // Predicated region
  $region22: #{actor_forward.1} parent=0 // pred_check
    _
  $region23: #{actor_forward.1} parent=0 // pred_check_branch
    %25 = sbr.rel (0) target = $region25
  $region24: #{actor_forward.1} parent=0 // pred_region
    _
  $region25: #{actor_forward.1} parent=0 // pred_fallthru
    _
  // Predicated region
  $region26: #{actor_forward.1} parent=0 // pred_check
    _
  $region27: #{actor_forward.1} parent=0 // pred_check_branch
    %27 = sbr.rel (0) target = $region29
  $region28: #{actor_forward.1} parent=0 // pred_region
    _
  $region29: #{actor_forward.1} parent=0 // pred_fallthru
    _
  // Predicated region
  $region30: #{actor_forward.1} parent=0 // pred_check
    _
  $region31: #{actor_forward.1} parent=0 // pred_check_branch
    %29 = sbr.rel (0) target = $region33
  $region32: #{actor_forward.1} parent=0 // pred_region
    _
  $region33: #{actor_forward.1} parent=0 // pred_fallthru
    _
  // Predicated region
  $region34: #{actor_forward.1} parent=0 // pred_check
    _
  $region35: #{actor_forward.1} parent=0 // pred_check_branch
    %31 = sbr.rel (0) target = $region37
  $region36: #{actor_forward.1} parent=0 // pred_region
    _
  $region37: #{actor_forward.1} parent=0 // pred_fallthru
    _
  %v32 = vld [vmem:[%s0] sm:$0xff]
  %v33 = vld [vmem:[%s1] sm:$0xff]
  %v34 = vld [vmem:[%s1 + $0x8] sm:$0xff]
  %v35 = vld [vmem:[%s1 + $0x10] sm:$0x7]
  %v36 = vld [vmem:[%s2] sm:$0x1]
  %v38 = vlaneseq
  %v39 = vshrl.u32 %v38, 7
  %v40 = vsub.s32 0, %v39
  %v41 = vrot.slane %v36, %v40
  %vm43 = vcmask 154624
  %v45 = vsel %vm43, %v32, 0
  %vm47 = vcmask 1042432
  %v49 = vsel %vm47, %v35, 0
  %51 = vmatprep.subr.mxu0 0.0
  %52 = vmatpush1.msra.mxu0 %v33
  %53 = vmatprep.subr.mxu0 0.0
  %54 = vmatpush1.msra.mxu0 %v34
  %55 = vmatprep.subr.mxu0 0.0
  %56 = vmatpush1.msra.mxu0 %v49
  %57 = vmatprep.subr.mxu0 0.0
  %58 = vmatpush1.msra.mxu0 0.0
  %59 = vmatprep.subr.mxu0 0.0
  %60 = vmatpush1.msra.mxu0 0.0
  %61 = vmatprep.subr.mxu0 0.0
  %62 = vmatpush1.msra.mxu0 0.0
  %63 = vmatprep.subr.mxu0 0.0
  %64 = vmatpush1.msra.mxu0 0.0
  %65 = vmatprep.subr.mxu0 0.0
  %66 = vmatpush1.msra.mxu0 0.0
  %67 = vmatprep.subr.mxu0 0.0
  %68 = vmatpush1.msra.mxu0 0.0
  %69 = vmatprep.subr.mxu0 0.0
  %70 = vmatpush1.msra.mxu0 0.0
  %71 = vmatprep.subr.mxu0 0.0
  %72 = vmatpush1.msra.mxu0 0.0
  %73 = vmatprep.subr.mxu0 0.0
  %74 = vmatpush1.msra.mxu0 0.0
  %75 = vmatprep.subr.mxu0 0.0
  %76 = vmatpush1.msra.mxu0 0.0
  %77 = vmatprep.subr.mxu0 0.0
  %78 = vmatpush1.msra.mxu0 0.0
  %79 = vmatprep.subr.mxu0 0.0
  %80 = vmatpush1.msra.mxu0 0.0
  %81 = vmatprep.subr.mxu0 0.0
  %82 = vmatpush1.msra.mxu0 0.0
  %83 = vmatprep.subr.mxu0 0.0
  %84 = vmatpush1.msra.mxu0 0.0
  %85 = vmatprep.subr.mxu0 0.0
  %86 = vmatpush1.msra.mxu0 0.0
  %87 = vmatprep.subr.mxu0 0.0
  %88 = vmatpush1.msra.mxu0 0.0
  %89 = vmatprep.subr.mxu0 0.0
  %90 = vmatpush1.msra.mxu0 0.0
  %91 = vmatprep.subr.mxu0 0.0
  %92 = vmatpush1.msra.mxu0 0.0
  %93 = vmatprep.subr.mxu0 0.0
  %94 = vmatpush1.msra.mxu0 0.0
  %95 = vmatprep.subr.mxu0 0.0
  %96 = vmatpush1.msra.mxu0 0.0
  %97 = vmatprep.subr.mxu0 0.0
  %98 = vmatpush1.msra.mxu0 0.0
  %99 = vmatprep.subr.mxu0 0.0
  %100 = vmatpush1.msra.mxu0 0.0
  %101 = vmatprep.subr.mxu0 0.0
  %102 = vmatpush1.msra.mxu0 0.0
  %103 = vmatprep.subr.mxu0 0.0
  %104 = vmatpush1.msra.mxu0 0.0
  %105 = vmatprep.subr.mxu0 0.0
  %106 = vmatpush1.msra.mxu0 0.0
  %107 = vmatprep.subr.mxu0 0.0
  %108 = vmatpush1.msra.mxu0 0.0
  %109 = vmatprep.subr.mxu0 0.0
  %110 = vmatpush1.msra.mxu0 0.0
  %111 = vmatprep.subr.mxu0 0.0
  %112 = vmatpush1.msra.mxu0 0.0
  %113 = vmatprep.subr.mxu0 0.0
  %114 = vmatpush1.msra.mxu0 0.0
  %115 = vmatprep.mubr.f32.mxu0 0.0
  %116 = vmatmul.mubr.f32.gmra.mrb[0].mxu0 %v45
  %v117 = vpop.f32.mrb[0].mxu0
  %v118 = vadd.f32 %v41, %v117
  %v119 = vpop.f32.mrb[0].mxu0
  %120 = vdwg.mxu0
  %v121 = vtanh.pop %v118
  %v122 = vld [vmem:[%s3] sm:$0xff]
  %v123 = vld [vmem:[%s3 + $0x8] sm:$0xff]
  %v124 = vld [vmem:[%s3 + $0x10] sm:$0xff]
  %v125 = vld [vmem:[%s3 + $0x18] sm:$0xff]
  %v126 = vld [vmem:[%s3 + $0x20] sm:$0xff]
  %v127 = vld [vmem:[%s3 + $0x28] sm:$0xff]
  %v128 = vld [vmem:[%s3 + $0x30] sm:$0xff]
  %v129 = vld [vmem:[%s3 + $0x38] sm:$0xff]
  %v130 = vld [vmem:[%s3 + $0x40] sm:$0xff]
  %v131 = vld [vmem:[%s3 + $0x48] sm:$0xff]
  %v132 = vld [vmem:[%s3 + $0x50] sm:$0xff]
  %v133 = vld [vmem:[%s3 + $0x58] sm:$0xff]
  %v134 = vld [vmem:[%s3 + $0x60] sm:$0xff]
  %v135 = vld [vmem:[%s3 + $0x68] sm:$0xff]
  %v136 = vld [vmem:[%s3 + $0x70] sm:$0xff]
  %v137 = vld [vmem:[%s3 + $0x78] sm:$0xff]
  %v138 = vld [vmem:[%s4] sm:$0x1]
  %v140 = vlaneseq
  %v141 = vshrl.u32 %v140, 7
  %v142 = vsub.s32 0, %v141
  %v143 = vrot.slane %v138, %v142
  %145 = vmatprep.subr.mxu0 0.0
  %146 = vmatpush1.msra.mxu0 %v122
  %147 = vmatprep.subr.mxu0 0.0
  %148 = vmatpush1.msra.mxu0 %v123
  %149 = vmatprep.subr.mxu0 0.0
  %150 = vmatpush1.msra.mxu0 %v124
  %151 = vmatprep.subr.mxu0 0.0
  %152 = vmatpush1.msra.mxu0 %v125
  %153 = vmatprep.subr.mxu0 0.0
  %154 = vmatpush1.msra.mxu0 %v126
  %155 = vmatprep.subr.mxu0 0.0
  %156 = vmatpush1.msra.mxu0 %v127
  %157 = vmatprep.subr.mxu0 0.0
  %158 = vmatpush1.msra.mxu0 %v128
  %159 = vmatprep.subr.mxu0 0.0
  %160 = vmatpush1.msra.mxu0 %v129
  %161 = vmatprep.subr.mxu0 0.0
  %162 = vmatpush1.msra.mxu0 %v130
  %163 = vmatprep.subr.mxu0 0.0
  %164 = vmatpush1.msra.mxu0 %v131
  %165 = vmatprep.subr.mxu0 0.0
  %166 = vmatpush1.msra.mxu0 %v132
  %167 = vmatprep.subr.mxu0 0.0
  %168 = vmatpush1.msra.mxu0 %v133
  %169 = vmatprep.subr.mxu0 0.0
  %170 = vmatpush1.msra.mxu0 %v134
  %171 = vmatprep.subr.mxu0 0.0
  %172 = vmatpush1.msra.mxu0 %v135
  %173 = vmatprep.subr.mxu0 0.0
  %174 = vmatpush1.msra.mxu0 %v136
  %175 = vmatprep.subr.mxu0 0.0
  %176 = vmatpush1.msra.mxu0 %v137
  %177 = vmatprep.subr.mxu0 0.0
  %178 = vmatpush1.msra.mxu0 0.0
  %179 = vmatprep.subr.mxu0 0.0
  %180 = vmatpush1.msra.mxu0 0.0
  %181 = vmatprep.subr.mxu0 0.0
  %182 = vmatpush1.msra.mxu0 0.0
  %183 = vmatprep.subr.mxu0 0.0
  %184 = vmatpush1.msra.mxu0 0.0
  %185 = vmatprep.subr.mxu0 0.0
  %186 = vmatpush1.msra.mxu0 0.0
  %187 = vmatprep.subr.mxu0 0.0
  %188 = vmatpush1.msra.mxu0 0.0
  %189 = vmatprep.subr.mxu0 0.0
  %190 = vmatpush1.msra.mxu0 0.0
  %191 = vmatprep.subr.mxu0 0.0
  %192 = vmatpush1.msra.mxu0 0.0
  %193 = vmatprep.subr.mxu0 0.0
  %194 = vmatpush1.msra.mxu0 0.0
  %195 = vmatprep.subr.mxu0 0.0
  %196 = vmatpush1.msra.mxu0 0.0
  %197 = vmatprep.subr.mxu0 0.0
  %198 = vmatpush1.msra.mxu0 0.0
  %199 = vmatprep.subr.mxu0 0.0
  %200 = vmatpush1.msra.mxu0 0.0
  %201 = vmatprep.subr.mxu0 0.0
  %202 = vmatpush1.msra.mxu0 0.0
  %203 = vmatprep.subr.mxu0 0.0
  %204 = vmatpush1.msra.mxu0 0.0
  %205 = vmatprep.subr.mxu0 0.0
  %206 = vmatpush1.msra.mxu0 0.0
  %207 = vmatprep.subr.mxu0 0.0
  %208 = vmatpush1.msra.mxu0 0.0
  %209 = vmatprep.mubr.f32.mxu0 0.0
  %210 = vmatmul.mubr.f32.gmra.mrb[0].mxu0 %v121
  %v211 = vpop.f32.mrb[0].mxu0
  %v212 = vadd.f32 %v143, %v211
  %v213 = vpop.f32.mrb[0].mxu0
  %214 = vdwg.mxu0
  %v215 = vtanh.pop %v212
  %v216 = vld [vmem:[%s5] sm:$0xff]
  %v217 = vld [vmem:[%s5 + $0x8] sm:$0xff]
  %v218 = vld [vmem:[%s5 + $0x10] sm:$0xff]
  %v219 = vld [vmem:[%s5 + $0x18] sm:$0xff]
  %v220 = vld [vmem:[%s5 + $0x20] sm:$0xff]
  %v221 = vld [vmem:[%s5 + $0x28] sm:$0xff]
  %v222 = vld [vmem:[%s5 + $0x30] sm:$0xff]
  %v223 = vld [vmem:[%s5 + $0x38] sm:$0xff]
  %v224 = vld [vmem:[%s5 + $0x40] sm:$0xff]
  %v225 = vld [vmem:[%s5 + $0x48] sm:$0xff]
  %v226 = vld [vmem:[%s5 + $0x50] sm:$0xff]
  %v227 = vld [vmem:[%s5 + $0x58] sm:$0xff]
  %v228 = vld [vmem:[%s5 + $0x60] sm:$0xff]
  %v229 = vld [vmem:[%s5 + $0x68] sm:$0xff]
  %v230 = vld [vmem:[%s5 + $0x70] sm:$0xff]
  %v231 = vld [vmem:[%s5 + $0x78] sm:$0xff]
  %v232 = vld [vmem:[%s6] sm:$0x1]
  %v234 = vlaneseq
  %v235 = vshrl.u32 %v234, 7
  %v236 = vsub.s32 0, %v235
  %v237 = vrot.slane %v232, %v236
  %239 = vmatprep.subr.mxu0 0.0
  %240 = vmatpush1.msra.mxu0 %v216
  %241 = vmatprep.subr.mxu0 0.0
  %242 = vmatpush1.msra.mxu0 %v217
  %243 = vmatprep.subr.mxu0 0.0
  %244 = vmatpush1.msra.mxu0 %v218
  %245 = vmatprep.subr.mxu0 0.0
  %246 = vmatpush1.msra.mxu0 %v219
  %247 = vmatprep.subr.mxu0 0.0
  %248 = vmatpush1.msra.mxu0 %v220
  %249 = vmatprep.subr.mxu0 0.0
  %250 = vmatpush1.msra.mxu0 %v221
  %251 = vmatprep.subr.mxu0 0.0
  %252 = vmatpush1.msra.mxu0 %v222
  %253 = vmatprep.subr.mxu0 0.0
  %254 = vmatpush1.msra.mxu0 %v223
  %255 = vmatprep.subr.mxu0 0.0
  %256 = vmatpush1.msra.mxu0 %v224
  %257 = vmatprep.subr.mxu0 0.0
  %258 = vmatpush1.msra.mxu0 %v225
  %259 = vmatprep.subr.mxu0 0.0
  %260 = vmatpush1.msra.mxu0 %v226
  %261 = vmatprep.subr.mxu0 0.0
  %262 = vmatpush1.msra.mxu0 %v227
  %263 = vmatprep.subr.mxu0 0.0
  %264 = vmatpush1.msra.mxu0 %v228
  %265 = vmatprep.subr.mxu0 0.0
  %266 = vmatpush1.msra.mxu0 %v229
  %267 = vmatprep.subr.mxu0 0.0
  %268 = vmatpush1.msra.mxu0 %v230
  %269 = vmatprep.subr.mxu0 0.0
  %270 = vmatpush1.msra.mxu0 %v231
  %271 = vmatprep.subr.mxu0 0.0
  %272 = vmatpush1.msra.mxu0 0.0
  %273 = vmatprep.subr.mxu0 0.0
  %274 = vmatpush1.msra.mxu0 0.0
  %275 = vmatprep.subr.mxu0 0.0
  %276 = vmatpush1.msra.mxu0 0.0
  %277 = vmatprep.subr.mxu0 0.0
  %278 = vmatpush1.msra.mxu0 0.0
  %279 = vmatprep.subr.mxu0 0.0
  %280 = vmatpush1.msra.mxu0 0.0
  %281 = vmatprep.subr.mxu0 0.0
  %282 = vmatpush1.msra.mxu0 0.0
  %283 = vmatprep.subr.mxu0 0.0
  %284 = vmatpush1.msra.mxu0 0.0
  %285 = vmatprep.subr.mxu0 0.0
  %286 = vmatpush1.msra.mxu0 0.0
  %287 = vmatprep.subr.mxu0 0.0
  %288 = vmatpush1.msra.mxu0 0.0
  %289 = vmatprep.subr.mxu0 0.0
  %290 = vmatpush1.msra.mxu0 0.0
  %291 = vmatprep.subr.mxu0 0.0
  %292 = vmatpush1.msra.mxu0 0.0
  %293 = vmatprep.subr.mxu0 0.0
  %294 = vmatpush1.msra.mxu0 0.0
  %295 = vmatprep.subr.mxu0 0.0
  %296 = vmatpush1.msra.mxu0 0.0
  %297 = vmatprep.subr.mxu0 0.0
  %298 = vmatpush1.msra.mxu0 0.0
  %299 = vmatprep.subr.mxu0 0.0
  %300 = vmatpush1.msra.mxu0 0.0
  %301 = vmatprep.subr.mxu0 0.0
  %302 = vmatpush1.msra.mxu0 0.0
  %303 = vmatprep.mubr.f32.mxu0 0.0
  %304 = vmatmul.mubr.f32.gmra.mrb[0].mxu0 %v215
  %v305 = vpop.f32.mrb[0].mxu0
  %v306 = vadd.f32 %v237, %v305
  %v307 = vpop.f32.mrb[0].mxu0
  %308 = vdwg.mxu0
  %v309 = vtanh.pop %v306
  %v310 = vld [vmem:[%s7] sm:$0xff]
  %v311 = vld [vmem:[%s7 + $0x8] sm:$0xff]
  %v312 = vld [vmem:[%s7 + $0x10] sm:$0xff]
  %v313 = vld [vmem:[%s7 + $0x18] sm:$0xff]
  %v314 = vld [vmem:[%s7 + $0x20] sm:$0xff]
  %v315 = vld [vmem:[%s7 + $0x28] sm:$0xff]
  %v316 = vld [vmem:[%s7 + $0x30] sm:$0xff]
  %v317 = vld [vmem:[%s7 + $0x38] sm:$0xff]
  %v318 = vld [vmem:[%s7 + $0x40] sm:$0xff]
  %v319 = vld [vmem:[%s7 + $0x48] sm:$0xff]
  %v320 = vld [vmem:[%s7 + $0x50] sm:$0xff]
  %v321 = vld [vmem:[%s7 + $0x58] sm:$0xff]
  %v322 = vld [vmem:[%s7 + $0x60] sm:$0xff]
  %v323 = vld [vmem:[%s7 + $0x68] sm:$0xff]
  %v324 = vld [vmem:[%s7 + $0x70] sm:$0xff]
  %v325 = vld [vmem:[%s7 + $0x78] sm:$0xff]
  %v326 = vld [vmem:[%s8] sm:$0x1]
  %v328 = vlaneseq
  %v329 = vshrl.u32 %v328, 7
  %v330 = vsub.s32 0, %v329
  %v331 = vrot.slane %v326, %v330
  %333 = vmatprep.subr.mxu0 0.0
  %334 = vmatpush1.msra.mxu0 %v310
  %335 = vmatprep.subr.mxu0 0.0
  %336 = vmatpush1.msra.mxu0 %v311
  %337 = vmatprep.subr.mxu0 0.0
  %338 = vmatpush1.msra.mxu0 %v312
  %339 = vmatprep.subr.mxu0 0.0
  %340 = vmatpush1.msra.mxu0 %v313
  %341 = vmatprep.subr.mxu0 0.0
  %342 = vmatpush1.msra.mxu0 %v314
  %343 = vmatprep.subr.mxu0 0.0
  %344 = vmatpush1.msra.mxu0 %v315
  %345 = vmatprep.subr.mxu0 0.0
  %346 = vmatpush1.msra.mxu0 %v316
  %347 = vmatprep.subr.mxu0 0.0
  %348 = vmatpush1.msra.mxu0 %v317
  %349 = vmatprep.subr.mxu0 0.0
  %350 = vmatpush1.msra.mxu0 %v318
  %351 = vmatprep.subr.mxu0 0.0
  %352 = vmatpush1.msra.mxu0 %v319
  %353 = vmatprep.subr.mxu0 0.0
  %354 = vmatpush1.msra.mxu0 %v320
  %355 = vmatprep.subr.mxu0 0.0
  %356 = vmatpush1.msra.mxu0 %v321
  %357 = vmatprep.subr.mxu0 0.0
  %358 = vmatpush1.msra.mxu0 %v322
  %359 = vmatprep.subr.mxu0 0.0
  %360 = vmatpush1.msra.mxu0 %v323
  %361 = vmatprep.subr.mxu0 0.0
  %362 = vmatpush1.msra.mxu0 %v324
  %363 = vmatprep.subr.mxu0 0.0
  %364 = vmatpush1.msra.mxu0 %v325
  %365 = vmatprep.subr.mxu0 0.0
  %366 = vmatpush1.msra.mxu0 0.0
  %367 = vmatprep.subr.mxu0 0.0
  %368 = vmatpush1.msra.mxu0 0.0
  %369 = vmatprep.subr.mxu0 0.0
  %370 = vmatpush1.msra.mxu0 0.0
  %371 = vmatprep.subr.mxu0 0.0
  %372 = vmatpush1.msra.mxu0 0.0
  %373 = vmatprep.subr.mxu0 0.0
  %374 = vmatpush1.msra.mxu0 0.0
  %375 = vmatprep.subr.mxu0 0.0
  %376 = vmatpush1.msra.mxu0 0.0
  %377 = vmatprep.subr.mxu0 0.0
  %378 = vmatpush1.msra.mxu0 0.0
  %379 = vmatprep.subr.mxu0 0.0
  %380 = vmatpush1.msra.mxu0 0.0
  %381 = vmatprep.subr.mxu0 0.0
  %382 = vmatpush1.msra.mxu0 0.0
  %383 = vmatprep.subr.mxu0 0.0
  %384 = vmatpush1.msra.mxu0 0.0
  %385 = vmatprep.subr.mxu0 0.0
  %386 = vmatpush1.msra.mxu0 0.0
  %387 = vmatprep.subr.mxu0 0.0
  %388 = vmatpush1.msra.mxu0 0.0
  %389 = vmatprep.subr.mxu0 0.0
  %390 = vmatpush1.msra.mxu0 0.0
  %391 = vmatprep.subr.mxu0 0.0
  %392 = vmatpush1.msra.mxu0 0.0
  %393 = vmatprep.subr.mxu0 0.0
  %394 = vmatpush1.msra.mxu0 0.0
  %395 = vmatprep.subr.mxu0 0.0
  %396 = vmatpush1.msra.mxu0 0.0
  %397 = vmatprep.mubr.f32.mxu0 0.0
  %398 = vmatmul.mubr.f32.gmra.mrb[0].mxu0 %v309
  %v399 = vpop.f32.mrb[0].mxu0
  %v400 = vadd.f32 %v331, %v399
  %v401 = vpop.f32.mrb[0].mxu0
  %402 = vdwg.mxu0
  %v403 = vtanh.pop %v400
  %404 = vst [vmem:[%s9] sm:$0xff] %v403
  // Predicated region
  $region38: #{actor_forward.1} parent=0 // pred_check
    _
  $region39: #{actor_forward.1} parent=0 // pred_check_branch
    %406 = sbr.rel (0) target = $region41
  $region40: #{actor_forward.1} parent=0 // pred_region
    _
  $region41: #{actor_forward.1} parent=0 // pred_fallthru
    _
  // Predicated region
  $region42: #{actor_forward.1} parent=0 // pred_check
    _
  $region43: #{actor_forward.1} parent=0 // pred_check_branch
    %408 = sbr.rel (0) target = $region45
  $region44: #{actor_forward.1} parent=0 // pred_region
    _
  $region45: #{actor_forward.1} parent=0 // pred_fallthru
    _

</llo_original>
